<compile_context>
chip_gen: v6e
topology: v6e:2x2x1
jax: 0.10.0
libtpu: 0.0.40
codegen_flags: <defaults>
</compile_context>

<pallas_src>
import functools
from collections import OrderedDict

import jax
import jax.numpy as jnp
from jax import lax
from jax.experimental import pallas as pl
from jax.experimental.pallas import tpu as pltpu

_NUM_PARTIALS = 2          # independent partial accumulators (v7x: 2 TCs/chip)
_ACC_ROWS = 8              # lane/sublane-dense accumulator block shape (8, 128)
_ACC_LANES = 128


def _make_topk_correct_kernel(n_total, tile_n, tiles_per_partial, k):
    """Counts rows (per partial) whose target class is within the top-k logits."""

    def kernel(pred_ref, tgt_ref, acc_ref):
        part = pl.program_id(0)          # "parallel" axis (per-core partial)
        step = pl.program_id(1)          # "arbitrary" reduction axis

        @pl.when(step == 0)
        def _():
            acc_ref[...] = jnp.zeros_like(acc_ref)

        logits = pred_ref[...].astype(jnp.float32)            # (TILE_N, C)
        tgt = tgt_ref[...]                                     # (TILE_N, 1) i32
        tn, c = logits.shape

        class_ids = lax.broadcasted_iota(jnp.int32, (tn, c), 1)
        one_hot = class_ids == tgt                             # (TILE_N, C)
        # Logit of the true class per row (lane reduce -> XLU slot, not VALU).
        tgt_logit = jnp.sum(jnp.where(one_hot, logits, 0.0), axis=1,
                            keepdims=True)                     # (TILE_N, 1)

        # A class outranks the target iff its logit is greater, or equal with
        # a lower class index (stable descending order, lax.top_k tie-break).
        beats = (logits > tgt_logit) | ((logits == tgt_logit) & (class_ids < tgt))
        rank = jnp.sum(beats.astype(jnp.int32), axis=1, keepdims=True)

        # Mask padded rows with the global row index (n_total is static).
        tile_idx = part * tiles_per_partial + step
        row = lax.broadcasted_iota(jnp.int32, (tn, 1), 0) + tile_idx * tile_n
        valid = row < n_total

        correct = jnp.where((rank < k) & valid, 1.0, 0.0)      # (TILE_N, 1)
        count = jnp.sum(correct)                               # scalar f32

        # Lane-dense accumulate: every element of this partial's (8, 128) block
        # holds the same running count (unmasked vst; counts are exact in f32
        # for any realistic batch size).
        acc_ref[...] += count

    return kernel


def _choose_tile_n(n, c):
    """Largest multiple-of-8 row tile fitting the per-step VMEM budget.

    Per grid step, the pipeline holds (double-buffered):
      logits tile : tile_n * C * 4 bytes
      target tile : tile_n * 128 * 4 bytes   (1 int32 lane, padded to 128 lanes)
    Budget ~4 MiB per buffer set keeps 2x double-buffering + the (8,128)
    accumulator far below the 32 MiB scoped VMEM limit on all chips.
    """
    budget_bytes = 4 * 1024 * 1024
    bytes_per_row = (max(c, 1) + _ACC_LANES) * 4
    cap = max(8, (budget_bytes // bytes_per_row) // 8 * 8)
    n_up = max(8, ((n + 7) // 8) * 8)
    return max(8, min(cap, n_up, 2048))


@functools.partial(jax.jit, static_argnames=("k", "tile_n"))
def _topk_correct_count_impl(prediction, target, *, k, tile_n):
    n, c = prediction.shape
    chunk = tile_n * _NUM_PARTIALS
    n_pad = pl.cdiv(n, chunk) * chunk
    tiles_per_partial = n_pad // chunk

    pred = prediction
    tgt = target.astype(jnp.int32).reshape(n, 1)
    if n_pad != n:
        pred = jnp.pad(pred, ((0, n_pad - n), (0, 0)))
        tgt = jnp.pad(tgt, ((0, n_pad - n), (0, 0)))

    out = pl.pallas_call(
        _make_topk_correct_kernel(n, tile_n, tiles_per_partial, int(k)),
        out_shape=jax.ShapeDtypeStruct((_NUM_PARTIALS * _ACC_ROWS, _ACC_LANES),
                                       jnp.float32),
        grid_spec=pltpu.PrefetchScalarGridSpec(
            num_scalar_prefetch=0,
            grid=(_NUM_PARTIALS, tiles_per_partial),
            in_specs=[
                pl.BlockSpec((tile_n, c),
                             lambda p, i: (p * tiles_per_partial + i, 0)),
                pl.BlockSpec((tile_n, 1),
                             lambda p, i: (p * tiles_per_partial + i, 0)),
            ],
            out_specs=pl.BlockSpec((_ACC_ROWS, _ACC_LANES), lambda p, i: (p, 0)),
        ),
        compiler_params=pltpu.CompilerParams(
            dimension_semantics=("parallel", "arbitrary"),
            vmem_limit_bytes=32 * 1024 * 1024,
        ),
    )(pred, tgt)

    # Element [p * 8, 0] of the output holds partial p's count.
    return jnp.sum(out[::_ACC_ROWS, 0])


def topk_correct_count_pallas(prediction, target, k, tile_n=None):
    """Number of rows whose target class is within the top-k logits."""
    n, c = prediction.shape
    if tile_n is None:
        tile_n = _choose_tile_n(n, c)
    return _topk_correct_count_impl(prediction, target, k=int(k),
                                    tile_n=int(tile_n))


# --- torch-free mirrors of the metric modules --------------------------------
class Accuracy:
    """JAX/Pallas equivalent of the PyTorch Accuracy metric module."""

    def __init__(self, topk=1):
        self.topk = topk

    def __call__(self, prediction, target):
        batch_size = target.shape[0]
        count = topk_correct_count_pallas(prediction, target, self.topk)
        return count * (100.0 / batch_size)

    def __repr__(self):
        return "Accuracy(topk={})".format(self.topk)


class LayerProbeAccuracies(Accuracy):
    """Applies top-k Accuracy to every layer-probe prediction of a model."""

    def __init__(self, probe_loss_name, topk=1):
        super().__init__(topk=topk)
        self.probe_loss_name = probe_loss_name

    def __call__(self, model, target):
        assert self.probe_loss_name in model.loss
        predictions = model.loss[self.probe_loss_name].last_outputs
        acc_per_probe = OrderedDict()
        for name, prediction in predictions.items():
            acc_per_probe[name] = Accuracy.__call__(self, prediction, target)
        return acc_per_probe
    # TODO(synk): torch.no_grad / nn.Module parameter registration are no-ops in JAX.


# --- minimal stand-ins for the model objects the metric reads ----------------
class _ProbeLoss:
    def __init__(self, last_outputs):
        self.last_outputs = last_outputs


class _Model:
    def __init__(self, loss):
        self.loss = loss


def _accuracy_reference(prediction, target, k):
    _, idx = jax.lax.top_k(prediction, k)
    correct = jnp.any(idx == target[:, None], axis=1)
    return 100.0 * jnp.sum(correct.astype(jnp.float32)) / target.shape[0]


if __name__ == "__main__":
    key = jax.random.PRNGKey(0)
    N, C = 8, 32                      # small shapes: batch=8, classes=32
    k_t, k_a, k_b, k_c = jax.random.split(key, 4)

    target = jax.random.randint(k_t, (N,), 0, C, dtype=jnp.int32)
    probes = OrderedDict(
        (name, jax.random.normal(kk, (N, C), dtype=jnp.float32))
        for name, kk in (("layer1", k_a), ("layer2", k_b), ("layer3", k_c))
    )
    model = _Model({"probe_ce": _ProbeLoss(probes)})

    for topk in (1, 3):
        metric = LayerProbeAccuracies("probe_ce", topk=topk)
        accs = metric(model, target)
        accs = {name: jax.block_until_ready(v) for name, v in accs.items()}
        for name, prediction in probes.items():
            ref = _accuracy_reference(prediction, target, topk)
            assert jnp.allclose(accs[name], ref, atol=1e-4), (topk, name, accs[name], ref)

    print("KERNEL_OK")
</pallas_src>

<mosaic_0001>
module attributes {stable_mosaic.version = 11 : i64} {
  func.func @kernel(%arg0: i32, %arg1: i32, %arg2: memref<8x32xf32, #tpu.memory_space<vmem>>, %arg3: memref<8x1xi32, #tpu.memory_space<vmem>>, %arg4: memref<8x128xf32, #tpu.memory_space<vmem>>) attributes {dimension_semantics = [#tpu.dimension_semantics<parallel>, #tpu.dimension_semantics<arbitrary>], iteration_bounds = array<i64: 2, 1>, scalar_prefetch = 0 : i64, scratch_operands = 0 : i64, tpu.core_type = #tpu.core_type<tc>, window_params = [{transform_indices = @transform_0, window_bounds = array<i64: 8, 32>}, {transform_indices = @transform_1, window_bounds = array<i64: 8, 1>}, {transform_indices = @transform_2, window_bounds = array<i64: 8, 128>}]} {
    %c0_i32 = arith.constant 0 : i32
    %0 = arith.cmpi eq, %arg1, %c0_i32 : i32
    %1 = arith.extui %0 : i1 to i32
    %c0_i32_0 = arith.constant 0 : i32
    %2 = arith.cmpi ne, %1, %c0_i32_0 : i32
    scf.if %2 {
      %cst_15 = arith.constant 0.000000e+00 : f32
      %45 = vector.broadcast %cst_15 : f32 to vector<8x128xf32>
      %c0_16 = arith.constant 0 : index
      %c0_17 = arith.constant 0 : index
      %46 = vector.load %arg4[%c0_16, %c0_17] : memref<8x128xf32, #tpu.memory_space<vmem>>, vector<8x128xf32>
      tpu.vector_store %arg4[%c0_16, %c0_17], %45 {strides = array<i32>} : memref<8x128xf32, #tpu.memory_space<vmem>>, vector<8x128xf32>,
    } else {
    }
    %c0 = arith.constant 0 : index
    %c0_1 = arith.constant 0 : index
    %3 = vector.load %arg2[%c0, %c0_1] : memref<8x32xf32, #tpu.memory_space<vmem>>, vector<8x32xf32>
    %c0_2 = arith.constant 0 : index
    %c0_3 = arith.constant 0 : index
    %4 = vector.load %arg3[%c0_2, %c0_3] : memref<8x1xi32, #tpu.memory_space<vmem>>, vector<8x1xi32>
    %5 = tpu.iota {dimensions = array<i32: 1>} : vector<8x32xi32>
    %6 = vector.broadcast %4 : vector<8x1xi32> to vector<8x32xi32>
    %7 = arith.cmpi eq, %5, %6 : vector<8x32xi32>
    %cst = arith.constant 0.000000e+00 : f32
    %8 = vector.broadcast %cst : f32 to vector<8x32xf32>
    %9 = arith.select %7, %3, %8 : vector<8x32xi1>, vector<8x32xf32>
    %cst_4 = arith.constant dense<0.000000e+00> : vector<8xf32>
    %10 = vector.multi_reduction <add>, %9, %cst_4 [1] : vector<8x32xf32> to vector<8xf32>
    %11 = vector.shape_cast %10 : vector<8xf32> to vector<8x1xf32>
    %12 = vector.broadcast %11 : vector<8x1xf32> to vector<8x32xf32>
    %13 = arith.cmpf ogt, %3, %12 : vector<8x32xf32>
    %14 = vector.broadcast %11 : vector<8x1xf32> to vector<8x32xf32>
    %15 = arith.cmpf oeq, %3, %14 : vector<8x32xf32>
    %16 = vector.broadcast %4 : vector<8x1xi32> to vector<8x32xi32>
    %17 = arith.cmpi slt, %5, %16 : vector<8x32xi32>
    %18 = arith.andi %15, %17 : vector<8x32xi1>
    %19 = arith.ori %13, %18 : vector<8x32xi1>
    %20 = arith.extui %19 : vector<8x32xi1> to vector<8x32xi32>
    %cst_5 = arith.constant dense<0> : vector<8xi32>
    %21 = vector.multi_reduction <add>, %20, %cst_5 [1] : vector<8x32xi32> to vector<8xi32>
    %22 = vector.shape_cast %21 : vector<8xi32> to vector<8x1xi32>
    %c1_i32 = arith.constant 1 : i32
    %23 = arith.muli %arg0, %c1_i32 : i32
    %24 = arith.addi %23, %arg1 : i32
    %25 = tpu.iota {dimensions = array<i32: 0>} : vector<8x1xi32>
    %c8_i32 = arith.constant 8 : i32
    %26 = arith.muli %24, %c8_i32 : i32
    %27 = vector.broadcast %26 : i32 to vector<8x1xi32>
    %28 = arith.addi %25, %27 : vector<8x1xi32>
    %c8_i32_6 = arith.constant 8 : i32
    %29 = vector.broadcast %c8_i32_6 : i32 to vector<8x1xi32>
    %30 = arith.cmpi slt, %28, %29 : vector<8x1xi32>
    %c1_i32_7 = arith.constant 1 : i32
    %31 = vector.broadcast %c1_i32_7 : i32 to vector<8x1xi32>
    %32 = arith.cmpi slt, %22, %31 : vector<8x1xi32>
    %33 = arith.andi %32, %30 : vector<8x1xi1>
    %cst_8 = arith.constant 1.000000e+00 : f32
    %cst_9 = arith.constant 0.000000e+00 : f32
    %34 = vector.broadcast %cst_8 : f32 to vector<8x1xf32>
    %35 = vector.broadcast %cst_9 : f32 to vector<8x1xf32>
    %36 = arith.select %33, %34, %35 : vector<8x1xi1>, vector<8x1xf32>
    %37 = vector.shape_cast %36 : vector<8x1xf32> to vector<1x8x1xf32>
    %cst_10 = arith.constant dense<0.000000e+00> : vector<1xf32>
    %38 = vector.multi_reduction <add>, %37, %cst_10 [1, 2] : vector<1x8x1xf32> to vector<1xf32>
    %39 = vector.shape_cast %38 : vector<1xf32> to vector<1x1x1xf32>
    %40 = vector.extract %39[0, 0, 0] : f32 from vector<1x1x1xf32>
    %c0_11 = arith.constant 0 : index
    %c0_12 = arith.constant 0 : index
    %41 = vector.load %arg4[%c0_11, %c0_12] : memref<8x128xf32, #tpu.memory_space<vmem>>, vector<8x128xf32>
    %42 = vector.broadcast %40 : f32 to vector<8x128xf32>
    %43 = arith.addf %41, %42 : vector<8x128xf32>
    %c0_13 = arith.constant 0 : index
    %c0_14 = arith.constant 0 : index
    %44 = vector.load %arg4[%c0_13, %c0_14] : memref<8x128xf32, #tpu.memory_space<vmem>>, vector<8x128xf32>
    tpu.vector_store %arg4[%c0_13, %c0_14], %43 {strides = array<i32>} : memref<8x128xf32, #tpu.memory_space<vmem>>, vector<8x128xf32>,
    return
  }
  func.func @transform_0(%arg0: i32, %arg1: i32) -> (i32, i32) {
    %c1_i32 = arith.constant 1 : i32
    %0 = arith.muli %arg0, %c1_i32 : i32
    %1 = arith.addi %0, %arg1 : i32
    %c0_i32 = arith.constant 0 : i32
    %c0_i32_0 = arith.constant 0 : i32
    return %1, %c0_i32 : i32, i32
  }
  func.func @transform_1(%arg0: i32, %arg1: i32) -> (i32, i32) {
    %c1_i32 = arith.constant 1 : i32
    %0 = arith.muli %arg0, %c1_i32 : i32
    %1 = arith.addi %0, %arg1 : i32
    %c0_i32 = arith.constant 0 : i32
    %c0_i32_0 = arith.constant 0 : i32
    return %1, %c0_i32 : i32, i32
  }
  func.func @transform_2(%arg0: i32, %arg1: i32) -> (i32, i32) {
    %c0_i32 = arith.constant 0 : i32
    %c0_i32_0 = arith.constant 0 : i32
    return %arg0, %c0_i32 : i32, i32
  }
}

</mosaic_0001>

<llo_original>
// kernel: _topk_correct_count_impl.1
$region0: #{_topk_correct_count_impl.1}
  #allocation0 [shape = 'u32[]', space=smem, size = 0x4, offset = 0x4, fixed_abs, tag = 'smem constant byte address 0x4 - core index']
  #allocation1 [shape = 'u32[144,128]{1,0:T(1,128)}', space=vmem, size = 0x12000, scoped, tag = 'internal scratch']
  %s0 = inlined_call_operand.vmem [shape: f32[16,32], index: 0, kind: input, shape index: {}]
  %s1 = inlined_call_operand.vmem [shape: s32[16,1], index: 1, kind: input, shape index: {}]
  %s2 = inlined_call_operand.vmem [shape: f32[16,128], index: 2, kind: output, shape index: {}]
  %s3 = sld [smem:[#allocation0]]
  $region45: #{_topk_correct_count_impl.1} parent=0
    _
  %s5 = ssub.s32 1, %s3
  %s6 = scalar_select 0, %s5, %s3
  loop: start=0, step=1, limit=4
  $region2: #{_topk_correct_count_impl.1} parent=0 // loop_pre_header
    _
  $region3: #{_topk_correct_count_impl.1} parent=0 // loop_header
    %s8 = sphi 0, %s12
    %p9 = scmp.ge.s32.totalorder %s8, 4
    %s15 = sphi 0, %s27
    %s16 = sphi 0, %s23
    %s17 = sphi 0, %s15
    %s18 = sphi 0, %s16
    %s19 = sphi 0, %s17
    %s20 = sphi 0, %s18
    %s32 = sphi 0, %s34
    %s35 = sphi 0, %s32
    %s36 = sphi 0, %s35
    %s52 = sphi 0, %s36
    %s60 = sphi 0, %s62
    %s63 = sphi 0, %s60
    %s64 = sphi 0, %s63
    %s80 = sphi 0, %s64
    %s86 = sphi 0, %s88
    %s89 = sphi 0, %s86
    %s90 = sphi 0, %s89
    %s106 = sphi 0, %s90
  $region4: #{_topk_correct_count_impl.1} parent=0 // loop_header_branch
    %11 = sbr.rel (%p9) target = $region8
  $region5: #{_topk_correct_count_impl.1} parent=0 // loop_body
    %s13 = ssub.s32 %s8, 1
    %s14 = ssub.s32 %s8, 2
    %s21 = sadd.s32 1, %s16
    %p22 = scmp.ge.s32.totalorder %s21, 1
    %s23 = scalar_select %p22, 0, %s21
    %s24 = sadd.s32 1, %s15
    %s25 = scalar_select %p22, %s24, %s15
    %p26 = scmp.ge.s32.totalorder %s25, 2
    %s27 = scalar_select %p26, 0, %s25
    %s28 = sadd.s32 %s15, %s16
    %s29 = sadd.s32 %s27, %s23
    %s30 = ssub.s32 %s28, %s29
    %p31 = scmp.eq.s32.totalorder %s30, 0
    %s33 = sadd.s32 %s32, 1
    %s34 = scalar_select %p31, %s32, %s33
    %p37 = pneg %p31
    %p38 = scmp.eq.s32.totalorder %s8, 1
    %p39 = por %p37, %p38
    %p40 = scmp.ne.s32.totalorder %s32, %s35
    %p41 = scmp.eq.s32.totalorder %s8, 0
    %p42 = por %p40, %p41
    %p43 = scmp.ne.s32.totalorder %s32, %s35
    %p44 = scmp.eq.s32.totalorder %s13, 1
    %p45 = por %p43, %p44
    %p46 = scmp.ne.s32.totalorder %s35, %s36
    %p47 = scmp.eq.s32.totalorder %s13, 0
    %p48 = por %p46, %p47
    %p49 = scmp.ne.s32.totalorder %s35, %s36
    %p50 = scmp.eq.s32.totalorder %s14, 1
    %p51 = por %p49, %p50
    %p53 = scmp.ne.s32.totalorder %s36, %s52
    %p54 = scmp.eq.s32.totalorder %s14, 0
    %p55 = por %p53, %p54
    %s56 = sadd.s32 %s15, %s16
    %s57 = sadd.s32 %s27, %s23
    %s58 = ssub.s32 %s56, %s57
    %p59 = scmp.eq.s32.totalorder %s58, 0
    %s61 = sadd.s32 %s60, 1
    %s62 = scalar_select %p59, %s60, %s61
    %p65 = pneg %p59
    %p66 = scmp.eq.s32.totalorder %s8, 1
    %p67 = por %p65, %p66
    %p68 = scmp.ne.s32.totalorder %s60, %s63
    %p69 = scmp.eq.s32.totalorder %s8, 0
    %p70 = por %p68, %p69
    %p71 = scmp.ne.s32.totalorder %s60, %s63
    %p72 = scmp.eq.s32.totalorder %s13, 1
    %p73 = por %p71, %p72
    %p74 = scmp.ne.s32.totalorder %s63, %s64
    %p75 = scmp.eq.s32.totalorder %s13, 0
    %p76 = por %p74, %p75
    %p77 = scmp.ne.s32.totalorder %s63, %s64
    %p78 = scmp.eq.s32.totalorder %s14, 1
    %p79 = por %p77, %p78
    %p81 = scmp.ne.s32.totalorder %s64, %s80
    %p82 = scmp.eq.s32.totalorder %s14, 0
    %p83 = por %p81, %p82
    %s84 = ssub.s32 %s15, %s27
    %p85 = scmp.eq.s32.totalorder %s84, 0
    %s87 = sadd.s32 %s86, 1
    %s88 = scalar_select %p85, %s86, %s87
    %p91 = pneg %p85
    %p92 = scmp.eq.s32.totalorder %s8, 1
    %p93 = por %p91, %p92
    %p94 = scmp.ne.s32.totalorder %s86, %s89
    %p95 = scmp.eq.s32.totalorder %s8, 0
    %p96 = por %p94, %p95
    %p97 = scmp.ne.s32.totalorder %s86, %s89
    %p98 = scmp.eq.s32.totalorder %s13, 1
    %p99 = por %p97, %p98
    %p100 = scmp.ne.s32.totalorder %s89, %s90
    %p101 = scmp.eq.s32.totalorder %s13, 0
    %p102 = por %p100, %p101
    %p103 = scmp.ne.s32.totalorder %s89, %s90
    %p104 = scmp.eq.s32.totalorder %s14, 1
    %p105 = por %p103, %p104
    %p107 = scmp.ne.s32.totalorder %s90, %s106
    %p108 = scmp.eq.s32.totalorder %s14, 0
    %p109 = por %p107, %p108
    %p110 = scmp.le.s32.totalorder 1, %s8
    %p111 = scmp.lt.s32.totalorder %s8, 3
    %p112 = pnand %p110, %p111
    %p113 = pneg %p112
    // Predicated region
    $region9: #{_topk_correct_count_impl.1} parent=5 // pred_check
      _
    $region10: #{_topk_correct_count_impl.1} parent=5 // pred_check_branch
      %115 = sbr.rel (%p112) target = $region12
    $region11: #{_topk_correct_count_impl.1} parent=5 // pred_region
      %s116 = ssub.s32 %s8, 1
    $region12: #{_topk_correct_count_impl.1} parent=5 // pred_fallthru
      _
    %p117 = scmp.lt.s32.totalorder %s8, 2
    // Predicated region
    $region13: #{_topk_correct_count_impl.1} parent=5 // pred_check
      %p118 = pneg %p117
    $region14: #{_topk_correct_count_impl.1} parent=5 // pred_check_branch
      %120 = sbr.rel (%p118) target = $region16
    $region15: #{_topk_correct_count_impl.1} parent=5 // pred_region
      // Predicated region
      $region17: #{_topk_correct_count_impl.1} parent=15 // pred_check
        %p121 = pneg %p42
      $region18: #{_topk_correct_count_impl.1} parent=15 // pred_check_branch
        %123 = sbr.rel (%p121) target = $region20
      $region19: #{_topk_correct_count_impl.1} parent=15 // pred_region
        %s124 = sadd.s32 %s15, %s16
        %p125 = scmp.lt.s32.totalorder %s124, 1
        %s126 = scalar_select %p125, %s124, 1
        %s127 = smul.addr %s126, 8
        %s128 = scalar_lea.vmem %s0, %s127
        %s129 = sadd.s32 %s15, %s16
      $region20: #{_topk_correct_count_impl.1} parent=15 // pred_fallthru
        _
      // Predicated region
      $region21: #{_topk_correct_count_impl.1} parent=15 // pred_check
        %p130 = pneg %p70
      $region22: #{_topk_correct_count_impl.1} parent=15 // pred_check_branch
        %132 = sbr.rel (%p130) target = $region24
      $region23: #{_topk_correct_count_impl.1} parent=15 // pred_region
        %s133 = sadd.s32 %s15, %s16
        %p134 = scmp.lt.s32.totalorder %s133, 1
        %s135 = scalar_select %p134, %s133, 1
        %s136 = smul.addr %s135, 8
        %s137 = scalar_lea.vmem %s1, %s136
        %s138 = sadd.s32 %s15, %s16
      $region24: #{_topk_correct_count_impl.1} parent=15 // pred_fallthru
        _
    $region16: #{_topk_correct_count_impl.1} parent=5 // pred_fallthru
      _
    %p139 = scmp.le.s32.totalorder 1, %s8
    %p140 = scmp.lt.s32.totalorder %s8, 3
    %p141 = pnand %p139, %p140
    %p142 = pneg %p141
    // Predicated region
    $region25: #{_topk_correct_count_impl.1} parent=5 // pred_check
      _
    $region26: #{_topk_correct_count_impl.1} parent=5 // pred_check_branch
      %144 = sbr.rel (%p141) target = $region28
    $region27: #{_topk_correct_count_impl.1} parent=5 // pred_region
      %s145 = ssub.s32 %s8, 1
      %s146 = sadd.s32 %s17, %s18
      %p147 = scmp.lt.s32.totalorder %s146, 1
      %s148 = scalar_select %p147, %s146, 1
      %s149 = smul.addr %s148, 8
      %s150 = scalar_lea.vmem %s0, %s149
      %p151 = pneg %p48
      %p152 = pneg %p45
      %s153 = sadd.s32 %s17, %s18
      %p154 = scmp.lt.s32.totalorder %s153, 1
      %s155 = scalar_select %p154, %s153, 1
      %s156 = smul.addr %s155, 8
      %s157 = scalar_lea.vmem %s1, %s156
      %p158 = pneg %p76
      %p159 = pneg %p73
      %p160 = pneg %p102
      %p161 = pneg %p99
      %p162 = scmp.lt.s32.totalorder %s17, 1
      %s163 = scalar_select %p162, %s17, 1
      %s164 = smul.addr %s163, 8
      %s165 = scalar_lea.vmem %s2, %s164
      %s166 = sadd.s32 %s17, %s18
      %p167 = scmp.lt.s32.totalorder %s166, 1
      %s168 = scalar_select %p167, %s166, 1
      %s169 = smul.addr %s168, 8
      %s170 = scalar_lea.vmem %s0, %s169
      %s171 = sadd.s32 %s17, %s18
      %s172 = sadd.s32 %s17, %s18
      %p173 = scmp.lt.s32.totalorder %s172, 1
      %s174 = scalar_select %p173, %s172, 1
      %s175 = smul.addr %s174, 8
      %s176 = scalar_lea.vmem %s1, %s175
      %s177 = sadd.s32 %s17, %s18
      %p178 = scmp.lt.s32.totalorder %s17, 1
      %s179 = scalar_select %p178, %s17, 1
      %s180 = smul.addr %s179, 8
      %s181 = scalar_lea.vmem %s2, %s180
      %p182 = scmp.eq.s32.totalorder %s18, 0
      // Predicated region
      $region29: #{_topk_correct_count_impl.1} parent=27 // pred_check
        %p183 = pneg %p182
      $region30: #{_topk_correct_count_impl.1} parent=27 // pred_check_branch
        %185 = sbr.rel (%p183) target = $region32
      $region31: #{_topk_correct_count_impl.1} parent=27 // pred_region
        %186 = vst [vmem:[%s181] sm:$0xff] 0.0
      $region32: #{_topk_correct_count_impl.1} parent=27 // pred_fallthru
        _
      %v187 = vld [vmem:[%s170] sm:$0xff]
      %v188 = vld [vmem:[%s176] sm:$0xff]
      %v189 = vlaneseq
      %v190 = vand.u32 %v189, 127
      %191 = vset.pattern.permute.xlu0 0
      %192 = vperm.xlu0 %191, %v188
      %v193 = vpop.permute.xlu0 %192
      %vm194 = vcmp.eq.s32.totalorder %v190, %v193
      %v195 = vsel %vm194, %v187, 0.0
      %vm196 = vcmask 261120
      %v197 = vsel %vm196, %v195, 0.0
      %198 = vadd.xlane.f32.xlu0 %v197
      %v199 = vpop.xlane.xlu0 %198
      %vm200 = vcmp.gt.f32.partialorder %v187, %v199
      %vm201 = vcmp.eq.f32.partialorder %v187, %v199
      %vm202 = vcmp.lt.s32.totalorder %v190, %v193
      %vm203 = vmand %vm201, %vm202
      %vm204 = vmor %vm200, %vm203
      %v205 = vsel %vm204, 1, 0
      %v206 = vsel %vm196, %v205, 0
      %v207 = vand.u32 %v206, 65535
      %v208 = vshrl.u32 %v206, 16
      %v209 = vcvt.s32.f32 %v207
      %v210 = vcvt.s32.f32 %v208
      %211 = vadd.xlane.f32.xlu0 %v209
      %v212 = vpop.xlane.xlu0 %211
      %213 = vadd.xlane.f32.xlu0 %v210
      %v214 = vpop.xlane.xlu0 %213
      %v215 = vcvt.f32.s32 %v212
      %v216 = vcvt.f32.s32 %v214
      %v217 = vshll.u32 %v216, 16
      %v218 = vadd.s32 %v217, %v215
      %s219 = sadd.s32 %s17, %s18
      %v220 = vlaneseq
      %v221 = vshrl.u32 %v220, 7
      %s222 = smul.u32 %s219, 8
      %v223 = vstv %s222
      %v224 = vadd.s32 %v221, %v223
      %vm225 = vcmp.lt.s32.totalorder %v224, 8
      %vm226 = vcmp.lt.s32.totalorder %v218, 1
      %vm227 = vmand %vm226, %vm225
      %v228 = vsel %vm227, 1.0, 0.0
      %vm229 = vcmask 7168
      %v230 = vsel %vm229, %v228, 0.0
      %231 = vadd.xlane.f32.xlu0 %v230
      %v232 = vpop.xlane.xlu0 %231
      %v233 = vrot.slane %v232, 4
      %v234 = vadd.f32 %v232, %v233
      %v235 = vrot.slane %v234, 2
      %v236 = vadd.f32 %v234, %v235
      %v237 = vrot.slane %v236, 1
      %v238 = vadd.f32 %v236, %v237
      %s239 = vtos %v238
      %v240 = vld [vmem:[%s181] sm:$0xff]
      %v241 = vstv %s239
      %v242 = vadd.f32 %v240, %v241
      %243 = vst [vmem:[%s181] sm:$0xff] %v242
      %p244 = scmp.lt.s32.totalorder %s17, 1
      %s245 = scalar_select %p244, %s17, 1
      %s246 = smul.addr %s245, 8
      %s247 = scalar_lea.vmem %s2, %s246
      // Predicated region
      $region33: #{_topk_correct_count_impl.1} parent=27 // pred_check
        %p248 = pneg %p99
      $region34: #{_topk_correct_count_impl.1} parent=27 // pred_check_branch
        %250 = sbr.rel (%p248) target = $region36
      $region35: #{_topk_correct_count_impl.1} parent=27 // pred_region
        _
      $region36: #{_topk_correct_count_impl.1} parent=27 // pred_fallthru
        _
    $region28: #{_topk_correct_count_impl.1} parent=5 // pred_fallthru
      _
    %p251 = scmp.le.s32.totalorder 2, %s8
    // Predicated region
    $region37: #{_topk_correct_count_impl.1} parent=5 // pred_check
      %p252 = pneg %p251
    $region38: #{_topk_correct_count_impl.1} parent=5 // pred_check_branch
      %254 = sbr.rel (%p252) target = $region40
    $region39: #{_topk_correct_count_impl.1} parent=5 // pred_region
      %s255 = ssub.s32 %s8, 2
      // Predicated region
      $region41: #{_topk_correct_count_impl.1} parent=39 // pred_check
        %p256 = pneg %p105
      $region42: #{_topk_correct_count_impl.1} parent=39 // pred_check_branch
        %258 = sbr.rel (%p256) target = $region44
      $region43: #{_topk_correct_count_impl.1} parent=39 // pred_region
        %p259 = scmp.lt.s32.totalorder %s19, 1
        %s260 = scalar_select %p259, %s19, 1
        %s261 = smul.addr %s260, 8
        %s262 = scalar_lea.vmem %s2, %s261
      $region44: #{_topk_correct_count_impl.1} parent=39 // pred_fallthru
        _
    $region40: #{_topk_correct_count_impl.1} parent=5 // pred_fallthru
      _
  $region6: #{_topk_correct_count_impl.1} parent=0 // loop_footer
    %s12 = sadd.s32 1, %s8
  $region7: #{_topk_correct_count_impl.1} parent=0 // loop_footer_branch
    %7 = sbr.rel target = $region3
  $region8: #{_topk_correct_count_impl.1} parent=0 // loop_exit
    _

</llo_original>
